<compile_context>
chip_gen: v5e
topology: v5e:2x2
jax: 0.10.0
libtpu: 0.0.40
codegen_flags: <defaults>
</compile_context>

<pallas_src>
import jax
import jax.numpy as jnp
from jax.experimental import pallas as pl
from jax.experimental.pallas import tpu as pltpu

LN_EPS = 1e-5  # PyTorch nn.LayerNorm default


def mlp_kernel(x_ref, w1_ref, b1_ref, w2_ref, b2_ref, g_ref, beta_ref,
               w3_ref, b3_ref, o_ref):
    # Linear(64 -> 32) + ReLU.  bf16 MXU operands, f32 accumulation.
    x = x_ref[...].astype(jnp.bfloat16)
    h = jnp.dot(x, w1_ref[...], preferred_element_type=jnp.float32) + b1_ref[...]
    h = jnp.maximum(h, 0.0)

    # Dropout(p=0.5): identity in eval mode.

    # Linear(32 -> 32) + Tanh.
    h = jnp.dot(h.astype(jnp.bfloat16), w2_ref[...],
                preferred_element_type=jnp.float32) + b2_ref[...]
    h = jnp.tanh(h)

    # LayerNorm(32): var = E[h^2] - E[h]^2 (two back-to-back XLU reductions).
    mean = jnp.mean(h, axis=-1, keepdims=True)
    mean_sq = jnp.mean(h * h, axis=-1, keepdims=True)
    var = mean_sq - mean * mean
    h = (h - mean) * jax.lax.rsqrt(var + LN_EPS)
    h = h * g_ref[...] + beta_ref[...]

    # Final Linear(32 -> 16).
    o = jnp.dot(h.astype(jnp.bfloat16), w3_ref[...],
                preferred_element_type=jnp.float32) + b3_ref[...]
    o_ref[...] = o.astype(o_ref.dtype)


def _cdiv(a, b):
    return -(-a // b)


def _round_up(n, m):
    return _cdiv(n, m) * m


def fully_connected_forward(x, params, *, block_b=8192,
                            vmem_limit_bytes=48 * 1024 * 1024):
    """x: (B, ...) flattened to (B, input_dim); returns (B, output_dim) f32."""
    B = x.shape[0]
    x2d = x.reshape(B, -1)
    d_in = x2d.shape[1]
    (w1, b1, w2, b2, g, beta, w3, b3) = params
    d_out = w3.shape[1]

    # bf16 weights for single-pass MXU matmuls (tiny; cast is negligible).
    # Biases / LayerNorm affine stay f32 — they add into the f32 accumulator.
    w1b, w2b, w3b = (w.astype(jnp.bfloat16) for w in (w1, w2, w3))

    # Batch tile: multiple of 8 (sublane constraint), capped by block_b and,
    # for large batches, capped so the grid has >= ~8 steps (megacore +
    # pipeline depth).
    tb = min(block_b, _round_up(B, 8))
    tb_split = _round_up(_cdiv(B, 8), 8)
    if tb_split >= 1024:
        tb = min(tb, tb_split)
    tb = max(tb, 8)

    resident = lambda i: (0, 0)  # weights/biases: same block every grid step

    return pl.pallas_call(
        mlp_kernel,
        out_shape=jax.ShapeDtypeStruct((B, d_out), jnp.float32),
        grid=(_cdiv(B, tb),),
        in_specs=[
            pl.BlockSpec((tb, d_in), lambda i: (i, 0)),   # streamed activations
            pl.BlockSpec(w1b.shape, resident),
            pl.BlockSpec(b1.shape, resident),
            pl.BlockSpec(w2b.shape, resident),
            pl.BlockSpec(b2.shape, resident),
            pl.BlockSpec(g.shape, resident),
            pl.BlockSpec(beta.shape, resident),
            pl.BlockSpec(w3b.shape, resident),
            pl.BlockSpec(b3.shape, resident),
        ],
        out_specs=pl.BlockSpec((tb, d_out), lambda i: (i, 0)),
        compiler_params=pltpu.CompilerParams(
            dimension_semantics=("parallel",),
            vmem_limit_bytes=vmem_limit_bytes),
    )(x2d, w1b, b1, w2b, b2, g, beta, w3b, b3)


def init_params(key, input_dim=64, hidden=32, output_dim=16):
    """Deterministic param init (uniform, like PyTorch's default Linear init)."""
    ks = jax.random.split(key, 6)

    def linear(kw, kb, din, dout):
        bound = 1.0 / (din ** 0.5)
        w = jax.random.uniform(kw, (din, dout), jnp.float32, -bound, bound)
        b = jax.random.uniform(kb, (1, dout), jnp.float32, -bound, bound)
        return w, b

    w1, b1 = linear(ks[0], ks[1], input_dim, hidden)
    w2, b2 = linear(ks[2], ks[3], hidden, hidden)
    g = jnp.ones((1, hidden), jnp.float32)       # LayerNorm gamma
    beta = jnp.zeros((1, hidden), jnp.float32)   # LayerNorm beta
    w3, b3 = linear(ks[4], ks[5], hidden, output_dim)
    return (w1, b1, w2, b2, g, beta, w3, b3)


def reference_forward(x, params, *, mimic_kernel=False):
    """Pure-JAX reference.

    mimic_kernel=True reproduces the kernel's bf16 MXU operands / f32
    accumulation and its LayerNorm formulation, so the comparison is tight.
    mimic_kernel=False is the straight f32 (PyTorch-semantics) reference.
    """
    (w1, b1, w2, b2, g, beta, w3, b3) = params

    def mm(a, w):
        if mimic_kernel:
            return jnp.dot(a.astype(jnp.bfloat16), w.astype(jnp.bfloat16),
                           preferred_element_type=jnp.float32)
        return jnp.dot(a.astype(jnp.float32), w,
                       precision=jax.lax.Precision.HIGHEST)

    h = x.reshape(x.shape[0], -1)
    h = jnp.maximum(mm(h, w1) + b1, 0.0)
    h = jnp.tanh(mm(h, w2) + b2)
    mean = jnp.mean(h, axis=-1, keepdims=True)
    if mimic_kernel:
        var = jnp.mean(h * h, axis=-1, keepdims=True) - mean * mean
        h = (h - mean) * jax.lax.rsqrt(var + LN_EPS)
    else:
        var = jnp.mean((h - mean) ** 2, axis=-1, keepdims=True)
        h = (h - mean) / jnp.sqrt(var + LN_EPS)
    h = h * g + beta
    return mm(h, w3) + b3


if __name__ == "__main__":
    key = jax.random.PRNGKey(0)
    k_x, k_p, k_mid, k_big = jax.random.split(key, 4)

    params = init_params(k_p, input_dim=64, hidden=32, output_dim=16)

    # 1) Small input consistent with input_dim=64 after flatten: (B=2, 4, 4, 4).
    x = jax.random.normal(k_x, (2, 4, 4, 4), jnp.float32)
    out = jax.block_until_ready(fully_connected_forward(x, params))
    assert out.shape == (2, 16)
    assert jnp.allclose(out, reference_forward(x, params, mimic_kernel=True),
                        atol=2e-3, rtol=2e-3)
    # Loose parity vs. pure-f32 PyTorch-style math (bf16 MXU operands).
    assert jnp.allclose(out, reference_forward(x, params),
                        atol=5e-2, rtol=5e-2)

    # 2) Multi-step grid + partial (masked) last block: B=300, 64-row tile.
    x_mid = jax.random.normal(k_mid, (300, 4, 4, 4), jnp.float32)
    out_mid = jax.block_until_ready(
        fully_connected_forward(x_mid, params, block_b=64))
    assert out_mid.shape == (300, 16)
    assert jnp.allclose(out_mid,
                        reference_forward(x_mid, params, mimic_kernel=True),
                        atol=2e-3, rtol=2e-3)

    # 3) Default-tile path (>=8-grid-steps cap) with bf16-streamed activations
    #    and a ragged last block.
    x_big = jax.random.normal(k_big, (11111, 64), jnp.float32).astype(jnp.bfloat16)
    out_big = jax.block_until_ready(fully_connected_forward(x_big, params))
    assert out_big.shape == (11111, 16)
    assert jnp.allclose(out_big,
                        reference_forward(x_big, params, mimic_kernel=True),
                        atol=2e-3, rtol=2e-3)

    print("KERNEL_OK")
</pallas_src>

<mosaic_0001>
module attributes {stable_mosaic.version = 11 : i64} {
  func.func @mlp_kernel(%arg0: i32, %arg1: memref<8x64xf32, #tpu.memory_space<vmem>>, %arg2: memref<64x32xbf16, #tpu.memory_space<vmem>>, %arg3: memref<1x32xf32, #tpu.memory_space<vmem>>, %arg4: memref<32x32xbf16, #tpu.memory_space<vmem>>, %arg5: memref<1x32xf32, #tpu.memory_space<vmem>>, %arg6: memref<1x32xf32, #tpu.memory_space<vmem>>, %arg7: memref<1x32xf32, #tpu.memory_space<vmem>>, %arg8: memref<32x16xbf16, #tpu.memory_space<vmem>>, %arg9: memref<1x16xf32, #tpu.memory_space<vmem>>, %arg10: memref<8x16xf32, #tpu.memory_space<vmem>>) attributes {dimension_semantics = [#tpu.dimension_semantics<parallel>], iteration_bounds = array<i64: 1>, scalar_prefetch = 0 : i64, scratch_operands = 0 : i64, tpu.core_type = #tpu.core_type<tc>, window_params = [{transform_indices = @transform_0, window_bounds = array<i64: 8, 64>}, {pipeline_mode = #tpu.pipeline_mode<synchronous>, transform_indices = @transform_1, window_bounds = array<i64: 64, 32>}, {pipeline_mode = #tpu.pipeline_mode<synchronous>, transform_indices = @transform_2, window_bounds = array<i64: 1, 32>}, {pipeline_mode = #tpu.pipeline_mode<synchronous>, transform_indices = @transform_3, window_bounds = array<i64: 32, 32>}, {pipeline_mode = #tpu.pipeline_mode<synchronous>, transform_indices = @transform_4, window_bounds = array<i64: 1, 32>}, {pipeline_mode = #tpu.pipeline_mode<synchronous>, transform_indices = @transform_5, window_bounds = array<i64: 1, 32>}, {pipeline_mode = #tpu.pipeline_mode<synchronous>, transform_indices = @transform_6, window_bounds = array<i64: 1, 32>}, {pipeline_mode = #tpu.pipeline_mode<synchronous>, transform_indices = @transform_7, window_bounds = array<i64: 32, 16>}, {pipeline_mode = #tpu.pipeline_mode<synchronous>, transform_indices = @transform_8, window_bounds = array<i64: 1, 16>}, {transform_indices = @transform_9, window_bounds = array<i64: 8, 16>}]} {
    %c0 = arith.constant 0 : index
    %c0_0 = arith.constant 0 : index
    %0 = vector.load %arg1[%c0, %c0_0] : memref<8x64xf32, #tpu.memory_space<vmem>>, vector<8x64xf32>
    %1 = arith.truncf %0 : vector<8x64xf32> to vector<8x64xbf16>
    %c0_1 = arith.constant 0 : index
    %c0_2 = arith.constant 0 : index
    %2 = vector.load %arg2[%c0_1, %c0_2] : memref<64x32xbf16, #tpu.memory_space<vmem>>, vector<64x32xbf16>
    %cst = arith.constant dense<0.000000e+00> : vector<8x32xf32>
    %3 = tpu.matmul %1, %2, %cst {dimension_numbers = #tpu.dot_dimension_numbers<[1], [0], [0], [1], [0, 0, 1, 1], [], []>} : vector<8x64xbf16>, vector<64x32xbf16>, vector<8x32xf32> -> vector<8x32xf32>
    %c0_3 = arith.constant 0 : index
    %c0_4 = arith.constant 0 : index
    %4 = vector.load %arg3[%c0_3, %c0_4] : memref<1x32xf32, #tpu.memory_space<vmem>>, vector<1x32xf32>
    %5 = vector.broadcast %4 : vector<1x32xf32> to vector<8x32xf32>
    %6 = arith.addf %3, %5 : vector<8x32xf32>
    %cst_5 = arith.constant 0.000000e+00 : f32
    %7 = vector.broadcast %cst_5 : f32 to vector<8x32xf32>
    %8 = arith.maximumf %6, %7 : vector<8x32xf32>
    %9 = arith.truncf %8 : vector<8x32xf32> to vector<8x32xbf16>
    %c0_6 = arith.constant 0 : index
    %c0_7 = arith.constant 0 : index
    %10 = vector.load %arg4[%c0_6, %c0_7] : memref<32x32xbf16, #tpu.memory_space<vmem>>, vector<32x32xbf16>
    %cst_8 = arith.constant dense<0.000000e+00> : vector<8x32xf32>
    %11 = tpu.matmul %9, %10, %cst_8 {dimension_numbers = #tpu.dot_dimension_numbers<[1], [0], [0], [1], [0, 0, 1, 1], [], []>} : vector<8x32xbf16>, vector<32x32xbf16>, vector<8x32xf32> -> vector<8x32xf32>
    %c0_9 = arith.constant 0 : index
    %c0_10 = arith.constant 0 : index
    %12 = vector.load %arg5[%c0_9, %c0_10] : memref<1x32xf32, #tpu.memory_space<vmem>>, vector<1x32xf32>
    %13 = vector.broadcast %12 : vector<1x32xf32> to vector<8x32xf32>
    %14 = arith.addf %11, %13 : vector<8x32xf32>
    %15 = math.tanh %14 : vector<8x32xf32>
    %cst_11 = arith.constant dense<0.000000e+00> : vector<8xf32>
    %16 = vector.multi_reduction <add>, %15, %cst_11 [1] : vector<8x32xf32> to vector<8xf32>
    %17 = vector.shape_cast %16 : vector<8xf32> to vector<8x1xf32>
    %cst_12 = arith.constant 3.200000e+01 : f32
    %18 = vector.broadcast %cst_12 : f32 to vector<8x1xf32>
    %19 = arith.divf %17, %18 : vector<8x1xf32>
    %20 = arith.mulf %15, %15 : vector<8x32xf32>
    %cst_13 = arith.constant dense<0.000000e+00> : vector<8xf32>
    %21 = vector.multi_reduction <add>, %20, %cst_13 [1] : vector<8x32xf32> to vector<8xf32>
    %22 = vector.shape_cast %21 : vector<8xf32> to vector<8x1xf32>
    %cst_14 = arith.constant 3.200000e+01 : f32
    %23 = vector.broadcast %cst_14 : f32 to vector<8x1xf32>
    %24 = arith.divf %22, %23 : vector<8x1xf32>
    %25 = arith.mulf %19, %19 : vector<8x1xf32>
    %26 = arith.subf %24, %25 : vector<8x1xf32>
    %27 = vector.broadcast %19 : vector<8x1xf32> to vector<8x32xf32>
    %28 = arith.subf %15, %27 : vector<8x32xf32>
    %cst_15 = arith.constant 9.99999974E-6 : f32
    %29 = vector.broadcast %cst_15 : f32 to vector<8x1xf32>
    %30 = arith.addf %26, %29 : vector<8x1xf32>
    %31 = math.rsqrt %30 : vector<8x1xf32>
    %32 = vector.broadcast %31 : vector<8x1xf32> to vector<8x32xf32>
    %33 = arith.mulf %28, %32 : vector<8x32xf32>
    %c0_16 = arith.constant 0 : index
    %c0_17 = arith.constant 0 : index
    %34 = vector.load %arg6[%c0_16, %c0_17] : memref<1x32xf32, #tpu.memory_space<vmem>>, vector<1x32xf32>
    %35 = vector.broadcast %34 : vector<1x32xf32> to vector<8x32xf32>
    %36 = arith.mulf %33, %35 : vector<8x32xf32>
    %c0_18 = arith.constant 0 : index
    %c0_19 = arith.constant 0 : index
    %37 = vector.load %arg7[%c0_18, %c0_19] : memref<1x32xf32, #tpu.memory_space<vmem>>, vector<1x32xf32>
    %38 = vector.broadcast %37 : vector<1x32xf32> to vector<8x32xf32>
    %39 = arith.addf %36, %38 : vector<8x32xf32>
    %40 = arith.truncf %39 : vector<8x32xf32> to vector<8x32xbf16>
    %c0_20 = arith.constant 0 : index
    %c0_21 = arith.constant 0 : index
    %41 = vector.load %arg8[%c0_20, %c0_21] : memref<32x16xbf16, #tpu.memory_space<vmem>>, vector<32x16xbf16>
    %cst_22 = arith.constant dense<0.000000e+00> : vector<8x16xf32>
    %42 = tpu.matmul %40, %41, %cst_22 {dimension_numbers = #tpu.dot_dimension_numbers<[1], [0], [0], [1], [0, 0, 1, 1], [], []>} : vector<8x32xbf16>, vector<32x16xbf16>, vector<8x16xf32> -> vector<8x16xf32>
    %c0_23 = arith.constant 0 : index
    %c0_24 = arith.constant 0 : index
    %43 = vector.load %arg9[%c0_23, %c0_24] : memref<1x16xf32, #tpu.memory_space<vmem>>, vector<1x16xf32>
    %44 = vector.broadcast %43 : vector<1x16xf32> to vector<8x16xf32>
    %45 = arith.addf %42, %44 : vector<8x16xf32>
    %c0_25 = arith.constant 0 : index
    %c0_26 = arith.constant 0 : index
    %46 = vector.load %arg10[%c0_25, %c0_26] : memref<8x16xf32, #tpu.memory_space<vmem>>, vector<8x16xf32>
    tpu.vector_store %arg10[%c0_25, %c0_26], %45 {strides = array<i32>} : memref<8x16xf32, #tpu.memory_space<vmem>>, vector<8x16xf32>,
    return
  }
  func.func @transform_0(%arg0: i32) -> (i32, i32) {
    %c0_i32 = arith.constant 0 : i32
    %c0_i32_0 = arith.constant 0 : i32
    return %arg0, %c0_i32 : i32, i32
  }
  func.func @transform_1(%arg0: i32) -> (i32, i32) {
    %c0_i32 = arith.constant 0 : i32
    %c0_i32_0 = arith.constant 0 : i32
    %c0_i32_1 = arith.constant 0 : i32
    return %c0_i32, %c0_i32_0 : i32, i32
  }
  func.func @transform_2(%arg0: i32) -> (i32, i32) {
    %c0_i32 = arith.constant 0 : i32
    %c0_i32_0 = arith.constant 0 : i32
    %c0_i32_1 = arith.constant 0 : i32
    return %c0_i32, %c0_i32_0 : i32, i32
  }
  func.func @transform_3(%arg0: i32) -> (i32, i32) {
    %c0_i32 = arith.constant 0 : i32
    %c0_i32_0 = arith.constant 0 : i32
    %c0_i32_1 = arith.constant 0 : i32
    return %c0_i32, %c0_i32_0 : i32, i32
  }
  func.func @transform_4(%arg0: i32) -> (i32, i32) {
    %c0_i32 = arith.constant 0 : i32
    %c0_i32_0 = arith.constant 0 : i32
    %c0_i32_1 = arith.constant 0 : i32
    return %c0_i32, %c0_i32_0 : i32, i32
  }
  func.func @transform_5(%arg0: i32) -> (i32, i32) {
    %c0_i32 = arith.constant 0 : i32
    %c0_i32_0 = arith.constant 0 : i32
    %c0_i32_1 = arith.constant 0 : i32
    return %c0_i32, %c0_i32_0 : i32, i32
  }
  func.func @transform_6(%arg0: i32) -> (i32, i32) {
    %c0_i32 = arith.constant 0 : i32
    %c0_i32_0 = arith.constant 0 : i32
    %c0_i32_1 = arith.constant 0 : i32
    return %c0_i32, %c0_i32_0 : i32, i32
  }
  func.func @transform_7(%arg0: i32) -> (i32, i32) {
    %c0_i32 = arith.constant 0 : i32
    %c0_i32_0 = arith.constant 0 : i32
    %c0_i32_1 = arith.constant 0 : i32
    return %c0_i32, %c0_i32_0 : i32, i32
  }
  func.func @transform_8(%arg0: i32) -> (i32, i32) {
    %c0_i32 = arith.constant 0 : i32
    %c0_i32_0 = arith.constant 0 : i32
    %c0_i32_1 = arith.constant 0 : i32
    return %c0_i32, %c0_i32_0 : i32, i32
  }
  func.func @transform_9(%arg0: i32) -> (i32, i32) {
    %c0_i32 = arith.constant 0 : i32
    %c0_i32_0 = arith.constant 0 : i32
    return %arg0, %c0_i32 : i32, i32
  }
}

</mosaic_0001>

<llo_original>
// kernel: tpu_custom_call.1
$region0: #{tpu_custom_call.1}
  #allocation0 [shape = 'u32[]', space=smem, size = 0x4, offset = 0x4, fixed_abs, tag = 'smem constant byte address 0x4 - core index']
  #allocation1 [shape = 'u32[72,128]{1,0:T(1,128)}', space=vmem, size = 0x9000, scoped, tag = 'internal scratch']
  %s0 = inlined_call_operand.vmem [shape: f32[2,64], index: 0, kind: input, shape index: {}]
  %s1 = inlined_call_operand.vmem [shape: bf16[64,32], index: 1, kind: input, shape index: {}]
  %s2 = inlined_call_operand.vmem [shape: f32[1,32], index: 2, kind: input, shape index: {}]
  %s3 = inlined_call_operand.vmem [shape: bf16[32,32], index: 3, kind: input, shape index: {}]
  %s4 = inlined_call_operand.vmem [shape: f32[1,32], index: 4, kind: input, shape index: {}]
  %s5 = inlined_call_operand.vmem [shape: f32[1,32], index: 5, kind: input, shape index: {}]
  %s6 = inlined_call_operand.vmem [shape: f32[1,32], index: 6, kind: input, shape index: {}]
  %s7 = inlined_call_operand.vmem [shape: bf16[32,16], index: 7, kind: input, shape index: {}]
  %s8 = inlined_call_operand.vmem [shape: f32[1,16], index: 8, kind: input, shape index: {}]
  %s9 = inlined_call_operand.hbm [shape: f32[2,16], index: 9, kind: output, shape index: {}]
  %s10 = sld [smem:[#allocation0]]
  $region46: #{tpu_custom_call.1} parent=0
    _
  %s12 = ssub.s32 1, %s10
  %s13 = scalar_select 0, %s12, %s10
  $region1: #{tpu_custom_call.1} parent=0
    #allocation2 [shape = 'u8[4096]{0}', space=vmem, size = 0x1000, scoped, tag = 'output window, operand 0, single buffered']
    #allocation3 [shape = 's32[1]{0}', space=sflag, size = 0x4, scoped, tag = 'scoped memory for tpu_custom_call.1']
    %14 = vsyncpa [#allocation3], 0
    // Predicated region
    $region2: #{tpu_custom_call.1} parent=1 // pred_check
      _
    $region3: #{tpu_custom_call.1} parent=1 // pred_check_branch
      %16 = sbr.rel (0) target = $region5
    $region4: #{tpu_custom_call.1} parent=1 // pred_region
      _
    $region5: #{tpu_custom_call.1} parent=1 // pred_fallthru
      _
    // Predicated region
    $region6: #{tpu_custom_call.1} parent=1 // pred_check
      _
    $region7: #{tpu_custom_call.1} parent=1 // pred_check_branch
      %18 = sbr.rel (0) target = $region9
    $region8: #{tpu_custom_call.1} parent=1 // pred_region
      _
    $region9: #{tpu_custom_call.1} parent=1 // pred_fallthru
      _
    // Predicated region
    $region10: #{tpu_custom_call.1} parent=1 // pred_check
      _
    $region11: #{tpu_custom_call.1} parent=1 // pred_check_branch
      %20 = sbr.rel (0) target = $region13
    $region12: #{tpu_custom_call.1} parent=1 // pred_region
      _
    $region13: #{tpu_custom_call.1} parent=1 // pred_fallthru
      _
    // Predicated region
    $region14: #{tpu_custom_call.1} parent=1 // pred_check
      _
    $region15: #{tpu_custom_call.1} parent=1 // pred_check_branch
      %22 = sbr.rel (0) target = $region17
    $region16: #{tpu_custom_call.1} parent=1 // pred_region
      _
    $region17: #{tpu_custom_call.1} parent=1 // pred_fallthru
      _
    // Predicated region
    $region18: #{tpu_custom_call.1} parent=1 // pred_check
      _
    $region19: #{tpu_custom_call.1} parent=1 // pred_check_branch
      %24 = sbr.rel (0) target = $region21
    $region20: #{tpu_custom_call.1} parent=1 // pred_region
      _
    $region21: #{tpu_custom_call.1} parent=1 // pred_fallthru
      _
    // Predicated region
    $region22: #{tpu_custom_call.1} parent=1 // pred_check
      _
    $region23: #{tpu_custom_call.1} parent=1 // pred_check_branch
      %26 = sbr.rel (0) target = $region25
    $region24: #{tpu_custom_call.1} parent=1 // pred_region
      _
    $region25: #{tpu_custom_call.1} parent=1 // pred_fallthru
      _
    // Predicated region
    $region26: #{tpu_custom_call.1} parent=1 // pred_check
      _
    $region27: #{tpu_custom_call.1} parent=1 // pred_check_branch
      %28 = sbr.rel (0) target = $region29
    $region28: #{tpu_custom_call.1} parent=1 // pred_region
      _
    $region29: #{tpu_custom_call.1} parent=1 // pred_fallthru
      _
    // Predicated region
    $region30: #{tpu_custom_call.1} parent=1 // pred_check
      _
    $region31: #{tpu_custom_call.1} parent=1 // pred_check_branch
      %30 = sbr.rel (0) target = $region33
    $region32: #{tpu_custom_call.1} parent=1 // pred_region
      _
    $region33: #{tpu_custom_call.1} parent=1 // pred_fallthru
      _
    // Predicated region
    $region34: #{tpu_custom_call.1} parent=1 // pred_check
      _
    $region35: #{tpu_custom_call.1} parent=1 // pred_check_branch
      %32 = sbr.rel (0) target = $region37
    $region36: #{tpu_custom_call.1} parent=1 // pred_region
      _
    $region37: #{tpu_custom_call.1} parent=1 // pred_fallthru
      _
    %v34 = vld [vmem:[%s0] sm:$0xff]
    %v35 = vpack.c.bf16 %v34, %v34
    %v36 = vld [vmem:[%s1] sm:$0xf]
    %v37 = vld [vmem:[%s1 + $0x4] sm:$0xf]
    %v38 = vld [vmem:[%s1 + $0x8] sm:$0xf]
    %v39 = vld [vmem:[%s1 + $0xc] sm:$0xf]
    %v40 = vld [vmem:[%s1 + $0x10] sm:$0xf]
    %v41 = vld [vmem:[%s1 + $0x14] sm:$0xf]
    %v42 = vld [vmem:[%s1 + $0x18] sm:$0xf]
    %v43 = vld [vmem:[%s1 + $0x1c] sm:$0xf]
    %v44 = vld [vmem:[%s2] sm:$0x1]
    %v46 = vperm.slane %v44, 0
    %v56 = vunpack.c.l.b16 %v36
    %v57 = vunpack.c.l.b16 %v37
    %v58 = vunpack.c.l.b16 %v38
    %v59 = vunpack.c.l.b16 %v39
    %v60 = vunpack.c.l.b16 %v40
    %v61 = vunpack.c.l.b16 %v41
    %v62 = vunpack.c.l.b16 %v42
    %v63 = vunpack.c.l.b16 %v43
    %v64 = vpack.c.b16 %v57, %v56
    %v65 = vpack.c.b16 %v59, %v58
    %v66 = vpack.c.b16 %v61, %v60
    %v67 = vpack.c.b16 %v63, %v62
    %vm72 = vcmask 523264
    %v74 = vsel %vm72, %v35, 0
    %76 = vmatpush.bf16.msra.mxu0 0
    %77 = vmatpush.bf16.msra.mxu0 0
    %78 = vmatpush.bf16.msra.mxu0 0
    %79 = vmatpush.bf16.msra.mxu0 0
    %80 = vmatpush.bf16.msra.mxu0 %v67
    %81 = vmatpush.bf16.msra.mxu0 %v66
    %82 = vmatpush.bf16.msra.mxu0 %v65
    %83 = vmatpush.bf16.msra.mxu0 %v64
    %84 = vmatmul.bf16.gmra.mxu0 %v74
    %v85 = vpop.f32.mrf.mxu0
    %v86 = vadd.f32 %v46, %v85
    %v87 = vpop.f32.mrf.mxu0
    %88 = vdwg.mxu0
    %v89 = vmax.f32 %v86, 0.0
    %v90 = vpack.c.bf16 %v89, %v89
    %v91 = vld [vmem:[%s3] sm:$0xf]
    %v92 = vld [vmem:[%s3 + $0x4] sm:$0xf]
    %v93 = vld [vmem:[%s3 + $0x8] sm:$0xf]
    %v94 = vld [vmem:[%s3 + $0xc] sm:$0xf]
    %v95 = vld [vmem:[%s4] sm:$0x1]
    %v97 = vperm.slane %v95, 0
    %v103 = vunpack.c.l.b16 %v91
    %v104 = vunpack.c.l.b16 %v92
    %v105 = vunpack.c.l.b16 %v93
    %v106 = vunpack.c.l.b16 %v94
    %v107 = vpack.c.b16 %v104, %v103
    %v108 = vpack.c.b16 %v106, %v105
    %vm111 = vcmask 261120
    %v113 = vsel %vm111, %v90, 0
    %115 = vmatpush.bf16.msra.mxu0 0
    %116 = vmatpush.bf16.msra.mxu0 0
    %117 = vmatpush.bf16.msra.mxu0 0
    %118 = vmatpush.bf16.msra.mxu0 0
    %119 = vmatpush.bf16.msra.mxu0 0
    %120 = vmatpush.bf16.msra.mxu0 0
    %121 = vmatpush.bf16.msra.mxu0 %v108
    %122 = vmatpush.bf16.msra.mxu0 %v107
    %123 = vmatmul.bf16.gmra.mxu0 %v113
    %v124 = vpop.f32.mrf.mxu0
    %v125 = vadd.f32 %v97, %v124
    %v126 = vpop.f32.mrf.mxu0
    %127 = vdwg.mxu0
    %v128 = vtanh.pop %v125
    %v129 = vsel %vm111, %v128, 0.0
    %130 = vadd.xlane.f32.xlu0 %v129
    %v131 = vpop.xlane.xlu0 %130
    %v132 = vrcp.pop 32.0
    %v133 = vmul.f32 32.0, %v132
    %v134 = vsub.f32 1.0, %v133
    %v135 = vmul.f32 %v132, %v134
    %v136 = vadd.f32 %v132, %v135
    %vm137 = vweird.f32 %v132
    %v138 = vsel %vm137, %v132, %v136
    %v139 = vmul.f32 %v131, %v138
    %v140 = vmul.f32 %v128, %v128
    %v141 = vsel %vm111, %v140, 0.0
    %142 = vadd.xlane.f32.xlu0 %v141
    %v143 = vpop.xlane.xlu0 %142
    %v144 = vmul.f32 %v143, %v138
    %v145 = vmul.f32 %v139, %v139
    %v146 = vsub.f32 %v144, %v145
    %v147 = vsub.f32 %v128, %v139
    %v148 = vadd.f32 %v146, 1e-05
    %v149 = vrsqrt.pop %v148
    %v150 = vmul.f32 %v149, %v148
    %v151 = vmul.f32 %v150, %v149
    %v152 = vmul.f32 0.5, %v151
    %v153 = vsub.f32 1.5, %v152
    %v154 = vmul.f32 %v149, %v153
    %vm155 = vweird.f32 %v148
    %vm156 = vweird.f32 %v149
    %vm157 = vmor %vm155, %vm156
    %v158 = vsel %vm157, %v149, %v154
    %v159 = vmul.f32 %v147, %v158
    %v160 = vld [vmem:[%s5] sm:$0x1]
    %v162 = vperm.slane %v160, 0
    %v164 = vmul.f32 %v159, %v162
    %v165 = vld [vmem:[%s6] sm:$0x1]
    %v167 = vperm.slane %v165, 0
    %v169 = vadd.f32 %v164, %v167
    %v170 = vpack.c.bf16 %v169, %v169
    %v171 = vld [vmem:[%s7] sm:$0xf]
    %v172 = vld [vmem:[%s7 + $0x4] sm:$0xf]
    %v173 = vld [vmem:[%s7 + $0x8] sm:$0xf]
    %v174 = vld [vmem:[%s7 + $0xc] sm:$0xf]
    %v175 = vld [vmem:[%s8] sm:$0x1]
    %v177 = vperm.slane %v175, 0
    %v183 = vunpack.c.l.b16 %v171
    %v184 = vunpack.c.l.b16 %v172
    %v185 = vunpack.c.l.b16 %v173
    %v186 = vunpack.c.l.b16 %v174
    %v187 = vpack.c.b16 %v184, %v183
    %v188 = vpack.c.b16 %v186, %v185
    %v192 = vsel %vm111, %v170, 0
    %194 = vmatpush.bf16.msra.mxu0 0
    %195 = vmatpush.bf16.msra.mxu0 0
    %196 = vmatpush.bf16.msra.mxu0 0
    %197 = vmatpush.bf16.msra.mxu0 0
    %198 = vmatpush.bf16.msra.mxu0 0
    %199 = vmatpush.bf16.msra.mxu0 0
    %200 = vmatpush.bf16.msra.mxu0 %v188
    %201 = vmatpush.bf16.msra.mxu0 %v187
    %202 = vmatmul.bf16.gmra.mxu0 %v192
    %v203 = vpop.f32.mrf.mxu0
    %v204 = vadd.f32 %v177, %v203
    %v205 = vpop.f32.mrf.mxu0
    %206 = vdwg.mxu0
    %vm207 = vcmask 130048
    %208 = vst.msk [vmem:[#allocation2] sm:$0xff] %vm207, %v204
    // Predicated region
    $region38: #{tpu_custom_call.1} parent=1 // pred_check
      _
    $region39: #{tpu_custom_call.1} parent=1 // pred_check_branch
      %210 = sbr.rel (0) target = $region41
    $region40: #{tpu_custom_call.1} parent=1 // pred_region
      %212 = vsyncadd [#allocation3], 96
      %s213 = sshll.u32 [#allocation2], 4
      %s214 = int_to_ptr.vmem [resolvable:$true] %s213
      %s215 = sshll.u32 %s9, 4
      %s216 = int_to_ptr.hbm [resolvable:$true] %s215
      %221 = dma.vmem_to_hbm [thread:$0]  %s214, 32, %s216, [#allocation3], 32, 32, 2
    $region41: #{tpu_custom_call.1} parent=1 // pred_fallthru
      _
    // Predicated region
    $region42: #{tpu_custom_call.1} parent=1 // pred_check
      _
    $region43: #{tpu_custom_call.1} parent=1 // pred_check_branch
      %223 = sbr.rel (0) target = $region45
    $region44: #{tpu_custom_call.1} parent=1 // pred_region
      %225 = dma.done [#allocation3], 128
    $region45: #{tpu_custom_call.1} parent=1 // pred_fallthru
      _
    %226 = vsyncpa [#allocation3], 1

</llo_original>
